<compile_context>
chip_gen: v7x
topology: tpu7x:2x2x1
jax: 0.10.0
libtpu: 0.0.40
codegen_flags: <defaults>
</compile_context>

<pallas_src>
import functools

import jax
import jax.numpy as jnp
from jax import lax
from jax.experimental import pallas as pl
from jax.experimental.pallas import tpu as pltpu

WIN = 5   # kernel_size = 5
PAD = 2   # padding = 2


def _coverage(idx, length):
    # Number of 5-wide, pad=2, stride-1 windows covering position `idx` on an
    # axis of size `length` (5 in the interior, 3/4 at the borders).
    return (1 + jnp.minimum(idx, PAD) + jnp.minimum(length - 1 - idx, PAD)).astype(jnp.float32)


def _similar_loss_kernel(w_row_ref, w_col_ref, real_ref, fake_ref, out_ref, *,
                         n_rows, block_rows, needs_mask):
    # real_ref / fake_ref: (block_rows, H*W) slab of the flattened (N*D, H*W) volume.
    # w_row_ref: (block_rows, 1) f32 coverage weight along flattened (N, D).
    # w_col_ref: (1, H*W)       f32 separable coverage weight along (H, W).
    # out_ref:   (8, 128) f32 block; partial sum written at [0, 0].
    d = real_ref[...].astype(jnp.float32) - fake_ref[...].astype(jnp.float32)
    term = (d * d) * w_row_ref[...] * w_col_ref[...]

    if needs_mask:  # static: only when the last grid block is ragged
        pid = pl.program_id(0)
        row = lax.broadcasted_iota(jnp.int32, (term.shape[0], 1), 0) + pid * block_rows
        term = jnp.where(row < n_rows, term, 0.0)   # select kills garbage (incl. NaN)

    partial = jnp.sum(term)

    r8 = lax.broadcasted_iota(jnp.int32, (8, 128), 0)
    c128 = lax.broadcasted_iota(jnp.int32, (8, 128), 1)
    out_ref[...] = jnp.where((r8 == 0) & (c128 == 0), partial, 0.0)


def similar_loss(real, fake):
    """real, fake: NCDHW (torch Conv3d layout) with C == 1. Returns scalar loss."""
    assert real.shape == fake.shape and real.ndim == 5 and real.shape[1] == 1
    n, _, dd, hh, ww = real.shape
    rows, cols = n * dd, hh * ww

    # Free (no-copy) flat views: no pad, no f32 upcast, lane-dense trailing axis.
    r2 = real.reshape(rows, cols)
    f2 = fake.reshape(rows, cols)

    # Host-precomputed separable coverage weights (tiny; hoists all integer
    # div/mod + window-count math out of the streaming loop).
    d_idx = jnp.arange(rows, dtype=jnp.int32) % dd
    w_row = _coverage(d_idx, dd).reshape(rows, 1)
    h_idx = jnp.arange(cols, dtype=jnp.int32) // ww
    w_idx = jnp.arange(cols, dtype=jnp.int32) % ww
    w_col = (_coverage(h_idx, hh) * _coverage(w_idx, ww)).reshape(1, cols)

    itemsize = jnp.dtype(real.dtype).itemsize
    target_block_bytes = 4 * 1024 * 1024            # per input block (x2 inputs x2 buffers)
    max_rows = max(8, target_block_bytes // max(1, cols * itemsize))
    if rows <= max_rows:
        block_rows = rows                           # full extent -> always a legal block dim
    else:
        block_rows = (int(max_rows) // 8) * 8       # multiple of 8 for (8,128) tiling
    grid = pl.cdiv(rows, block_rows)
    needs_mask = (rows % block_rows) != 0

    kernel = functools.partial(
        _similar_loss_kernel,
        n_rows=rows, block_rows=block_rows, needs_mask=needs_mask)

    cost = pl.CostEstimate(
        flops=5 * rows * cols,
        transcendentals=0,
        bytes_accessed=2 * rows * cols * itemsize + (rows + cols) * 4 + grid * 8 * 128 * 4)

    partials = pl.pallas_call(
        kernel,
        out_shape=jax.ShapeDtypeStruct((grid * 8, 128), jnp.float32),
        grid_spec=pltpu.PrefetchScalarGridSpec(
            num_scalar_prefetch=0,
            grid=(grid,),
            in_specs=[pl.BlockSpec((block_rows, 1), lambda i: (i, 0)),
                      pl.BlockSpec((1, cols), lambda i: (0, 0)),
                      pl.BlockSpec((block_rows, cols), lambda i: (i, 0)),
                      pl.BlockSpec((block_rows, cols), lambda i: (i, 0))],
            out_specs=pl.BlockSpec((8, 128), lambda i: (i, 0))),
        compiler_params=pltpu.CompilerParams(
            dimension_semantics=("parallel",),
            vmem_limit_bytes=32 * 1024 * 1024),
        cost_estimate=cost,
    )(w_row, w_col, r2, f2)

    denom = float(WIN ** 3) * float(n * dd * hh * ww)
    return jnp.sum(partials) / denom


def _reference(real, fake):
    # Pure-JAX reference of the torch forward (all-ones 5x5x5 conv, pad=2).
    dif2 = (real.astype(jnp.float32) - fake.astype(jnp.float32)) ** 2
    w = jnp.ones((1, 1, WIN, WIN, WIN), jnp.float32)
    s = lax.conv_general_dilated(
        dif2, w, window_strides=(1, 1, 1),
        padding=((PAD, PAD), (PAD, PAD), (PAD, PAD)),
        dimension_numbers=("NCDHW", "OIDHW", "NCDHW"))
    return jnp.mean(s / float(WIN ** 3))


if __name__ == "__main__":
    key = jax.random.PRNGKey(0)
    k1, k2 = jax.random.split(key)
    shape = (2, 1, 8, 16, 16)  # N, C=1, D, H, W
    real = jax.random.normal(k1, shape, dtype=jnp.float32)
    fake = jax.random.normal(k2, shape, dtype=jnp.float32)

    out = jax.block_until_ready(similar_loss(real, fake))
    ref = jax.block_until_ready(_reference(real, fake))
    assert jnp.allclose(out, ref, rtol=1e-4, atol=1e-6), (out, ref)
    print("KERNEL_OK")
</pallas_src>

<mosaic_0001>
module attributes {stable_mosaic.version = 11 : i64} {
  func.func @_similar_loss_kernel(%arg0: i32, %arg1: memref<16x1xf32, #tpu.memory_space<vmem>>, %arg2: memref<1x256xf32, #tpu.memory_space<vmem>>, %arg3: memref<16x256xf32, #tpu.memory_space<vmem>>, %arg4: memref<16x256xf32, #tpu.memory_space<vmem>>, %arg5: memref<8x128xf32, #tpu.memory_space<vmem>>) attributes {dimension_semantics = [#tpu.dimension_semantics<parallel>], iteration_bounds = array<i64: 1>, scalar_prefetch = 0 : i64, scratch_operands = 0 : i64, tpu.core_type = #tpu.core_type<tc>, window_params = [{transform_indices = @transform_0, window_bounds = array<i64: 16, 1>}, {pipeline_mode = #tpu.pipeline_mode<synchronous>, transform_indices = @transform_1, window_bounds = array<i64: 1, 256>}, {transform_indices = @transform_2, window_bounds = array<i64: 16, 256>}, {transform_indices = @transform_3, window_bounds = array<i64: 16, 256>}, {transform_indices = @transform_4, window_bounds = array<i64: 8, 128>}]} {
    %c0 = arith.constant 0 : index
    %c0_0 = arith.constant 0 : index
    %0 = vector.load %arg3[%c0, %c0_0] : memref<16x256xf32, #tpu.memory_space<vmem>>, vector<16x256xf32>
    %c0_1 = arith.constant 0 : index
    %c0_2 = arith.constant 0 : index
    %1 = vector.load %arg4[%c0_1, %c0_2] : memref<16x256xf32, #tpu.memory_space<vmem>>, vector<16x256xf32>
    %2 = arith.subf %0, %1 : vector<16x256xf32>
    %3 = arith.mulf %2, %2 : vector<16x256xf32>
    %c0_3 = arith.constant 0 : index
    %c0_4 = arith.constant 0 : index
    %4 = vector.load %arg1[%c0_3, %c0_4] : memref<16x1xf32, #tpu.memory_space<vmem>>, vector<16x1xf32>
    %5 = vector.broadcast %4 : vector<16x1xf32> to vector<16x256xf32>
    %6 = arith.mulf %3, %5 : vector<16x256xf32>
    %c0_5 = arith.constant 0 : index
    %c0_6 = arith.constant 0 : index
    %7 = vector.load %arg2[%c0_5, %c0_6] : memref<1x256xf32, #tpu.memory_space<vmem>>, vector<1x256xf32>
    %8 = vector.broadcast %7 : vector<1x256xf32> to vector<16x256xf32>
    %9 = arith.mulf %6, %8 : vector<16x256xf32>
    %10 = vector.shape_cast %9 : vector<16x256xf32> to vector<1x16x256xf32>
    %cst = arith.constant dense<0.000000e+00> : vector<1xf32>
    %11 = vector.multi_reduction <add>, %10, %cst [1, 2] : vector<1x16x256xf32> to vector<1xf32>
    %12 = vector.shape_cast %11 : vector<1xf32> to vector<1x1x1xf32>
    %13 = vector.extract %12[0, 0, 0] : f32 from vector<1x1x1xf32>
    %14 = tpu.iota {dimensions = array<i32: 0>} : vector<8x128xi32>
    %15 = tpu.iota {dimensions = array<i32: 1>} : vector<8x128xi32>
    %c0_i32 = arith.constant 0 : i32
    %16 = vector.broadcast %c0_i32 : i32 to vector<8x128xi32>
    %17 = arith.cmpi eq, %14, %16 : vector<8x128xi32>
    %c0_i32_7 = arith.constant 0 : i32
    %18 = vector.broadcast %c0_i32_7 : i32 to vector<8x128xi32>
    %19 = arith.cmpi eq, %15, %18 : vector<8x128xi32>
    %20 = arith.andi %17, %19 : vector<8x128xi1>
    %cst_8 = arith.constant 0.000000e+00 : f32
    %21 = vector.broadcast %13 : f32 to vector<8x128xf32>
    %22 = vector.broadcast %cst_8 : f32 to vector<8x128xf32>
    %23 = arith.select %20, %21, %22 : vector<8x128xi1>, vector<8x128xf32>
    %c0_9 = arith.constant 0 : index
    %c0_10 = arith.constant 0 : index
    %24 = vector.load %arg5[%c0_9, %c0_10] : memref<8x128xf32, #tpu.memory_space<vmem>>, vector<8x128xf32>
    tpu.vector_store %arg5[%c0_9, %c0_10], %23 {strides = array<i32>} : memref<8x128xf32, #tpu.memory_space<vmem>>, vector<8x128xf32>,
    return
  }
  func.func @transform_0(%arg0: i32) -> (i32, i32) {
    %c0_i32 = arith.constant 0 : i32
    %c0_i32_0 = arith.constant 0 : i32
    return %arg0, %c0_i32 : i32, i32
  }
  func.func @transform_1(%arg0: i32) -> (i32, i32) {
    %c0_i32 = arith.constant 0 : i32
    %c0_i32_0 = arith.constant 0 : i32
    %c0_i32_1 = arith.constant 0 : i32
    return %c0_i32, %c0_i32_0 : i32, i32
  }
  func.func @transform_2(%arg0: i32) -> (i32, i32) {
    %c0_i32 = arith.constant 0 : i32
    %c0_i32_0 = arith.constant 0 : i32
    return %arg0, %c0_i32 : i32, i32
  }
  func.func @transform_3(%arg0: i32) -> (i32, i32) {
    %c0_i32 = arith.constant 0 : i32
    %c0_i32_0 = arith.constant 0 : i32
    return %arg0, %c0_i32 : i32, i32
  }
  func.func @transform_4(%arg0: i32) -> (i32, i32) {
    %c0_i32 = arith.constant 0 : i32
    %c0_i32_0 = arith.constant 0 : i32
    return %arg0, %c0_i32 : i32, i32
  }
}

</mosaic_0001>

<llo_original>
// kernel: tpu_custom_call.1
$region0: #{tpu_custom_call.1}
  #allocation0 [shape = 'u32[]', space=smem, size = 0x4, offset = 0x4, fixed_abs, tag = 'smem constant byte address 0x4 - core index']
  #allocation1 [shape = 'u32[144,128]{1,0:T(1,128)}', space=vmem, size = 0x12000, scoped, tag = 'internal scratch']
  %s0 = inlined_call_operand.vmem [shape: f32[16,1], index: 0, kind: input, shape index: {}]
  %s1 = inlined_call_operand.vmem [shape: f32[1,256], index: 1, kind: input, shape index: {}]
  %s2 = inlined_call_operand.hbm [shape: f32[16,256], index: 2, kind: input, shape index: {}]
  %s3 = inlined_call_operand.hbm [shape: f32[16,256], index: 3, kind: input, shape index: {}]
  %s4 = inlined_call_operand.hbm [shape: f32[8,128], index: 4, kind: output, shape index: {}]
  %s5 = sld [smem:[#allocation0]]
  $region34: #{tpu_custom_call.1} parent=0
    _
  %s7 = ssub.s32 1, %s5
  %s8 = scalar_select 0, %s7, %s5
  $region1: #{tpu_custom_call.1} parent=0
    #allocation2 [shape = 'u8[16384]{0}', space=vmem, size = 0x4000, scoped, tag = 'input window, operand 2, single buffered']
    #allocation3 [shape = 's32[1]{0}', space=sflag, size = 0x4, scoped, tag = 'scoped memory for tpu_custom_call.1']
    #allocation4 [shape = 's32[1]{0}', space=sflag, size = 0x4, scoped, tag = 'scoped memory for tpu_custom_call.1']
    #allocation5 [shape = 'u8[16384]{0}', space=vmem, size = 0x4000, scoped, tag = 'input window, operand 3, single buffered']
    #allocation6 [shape = 's32[1]{0}', space=sflag, size = 0x4, scoped, tag = 'scoped memory for tpu_custom_call.1']
    #allocation7 [shape = 'u8[4096]{0}', space=vmem, size = 0x1000, scoped, tag = 'output window, operand 0, single buffered']
    %9 = vsyncpa [#allocation3], 0
    %10 = vsyncpa [#allocation6], 0
    %11 = vsyncpa [#allocation4], 0
    // Predicated region
    $region2: #{tpu_custom_call.1} parent=1 // pred_check
      _
    $region3: #{tpu_custom_call.1} parent=1 // pred_check_branch
      %13 = sbr.rel (0) target = $region5
    $region4: #{tpu_custom_call.1} parent=1 // pred_region
      _
    $region5: #{tpu_custom_call.1} parent=1 // pred_fallthru
      _
    // Predicated region
    $region6: #{tpu_custom_call.1} parent=1 // pred_check
      _
    $region7: #{tpu_custom_call.1} parent=1 // pred_check_branch
      %15 = sbr.rel (0) target = $region9
    $region8: #{tpu_custom_call.1} parent=1 // pred_region
      _
    $region9: #{tpu_custom_call.1} parent=1 // pred_fallthru
      _
    // Predicated region
    $region10: #{tpu_custom_call.1} parent=1 // pred_check
      _
    $region11: #{tpu_custom_call.1} parent=1 // pred_check_branch
      %17 = sbr.rel (0) target = $region13
    $region12: #{tpu_custom_call.1} parent=1 // pred_region
      %s19 = ssub.s32 512, 512
      %20 = vsyncadd [#allocation3], %s19
      %s21 = sshll.u32 [#allocation2], 4
      %s22 = int_to_ptr.vmem [resolvable:$true] %s21
      %27 = dma.hbm_to_vmem [thread:$0]  %s2, 512, %s22, [#allocation3], 256, 256, 16
    $region13: #{tpu_custom_call.1} parent=1 // pred_fallthru
      _
    // Predicated region
    $region14: #{tpu_custom_call.1} parent=1 // pred_check
      _
    $region15: #{tpu_custom_call.1} parent=1 // pred_check_branch
      %29 = sbr.rel (0) target = $region17
    $region16: #{tpu_custom_call.1} parent=1 // pred_region
      %s31 = ssub.s32 512, 512
      %32 = vsyncadd [#allocation6], %s31
      %s33 = sshll.u32 [#allocation5], 4
      %s34 = int_to_ptr.vmem [resolvable:$true] %s33
      %39 = dma.hbm_to_vmem [thread:$0]  %s3, 512, %s34, [#allocation6], 256, 256, 16
    $region17: #{tpu_custom_call.1} parent=1 // pred_fallthru
      _
    // Predicated region
    $region18: #{tpu_custom_call.1} parent=1 // pred_check
      _
    $region19: #{tpu_custom_call.1} parent=1 // pred_check_branch
      %41 = sbr.rel (0) target = $region21
    $region20: #{tpu_custom_call.1} parent=1 // pred_region
      %42 = dma.done [#allocation3], 512
    $region21: #{tpu_custom_call.1} parent=1 // pred_fallthru
      _
    // Predicated region
    $region22: #{tpu_custom_call.1} parent=1 // pred_check
      _
    $region23: #{tpu_custom_call.1} parent=1 // pred_check_branch
      %44 = sbr.rel (0) target = $region25
    $region24: #{tpu_custom_call.1} parent=1 // pred_region
      %45 = dma.done [#allocation6], 512
    $region25: #{tpu_custom_call.1} parent=1 // pred_fallthru
      _
    %v46 = vld [vmem:[#allocation2] sm:$0xff]
    %v47 = vld [vmem:[#allocation2 + $0x8] sm:$0xff]
    %v48 = vld [vmem:[#allocation2 + $0x10] sm:$0xff]
    %v49 = vld [vmem:[#allocation2 + $0x18] sm:$0xff]
    %v50 = vld [vmem:[#allocation5] sm:$0xff]
    %v51 = vld [vmem:[#allocation5 + $0x8] sm:$0xff]
    %v52 = vld [vmem:[#allocation5 + $0x10] sm:$0xff]
    %v53 = vld [vmem:[#allocation5 + $0x18] sm:$0xff]
    %v54 = vsub.f32 %v46, %v50
    %v55 = vsub.f32 %v47, %v51
    %v56 = vsub.f32 %v48, %v52
    %v57 = vsub.f32 %v49, %v53
    %v58 = vmul.f32 %v54, %v54
    %v59 = vmul.f32 %v55, %v55
    %v60 = vmul.f32 %v56, %v56
    %v61 = vmul.f32 %v57, %v57
    %v62 = vld [vmem:[%s0] sm:$0xff]
    %v63 = vld [vmem:[%s0 + $0x8] sm:$0xff]
    %65 = vset.pattern.permute.xlu0 0
    %66 = vperm.xlu0 %65, %v62
    %v67 = vpop.permute.xlu0 %66
    %70 = vset.pattern.permute.xlu0 0
    %71 = vperm.xlu0 %70, %v63
    %v72 = vpop.permute.xlu0 %71
    %v74 = vmul.f32 %v58, %v67
    %v75 = vmul.f32 %v59, %v67
    %v76 = vmul.f32 %v60, %v72
    %v77 = vmul.f32 %v61, %v72
    %v78 = vld [vmem:[%s1] sm:$0x3]
    %v80 = vlaneseq
    %v81 = vshrl.u32 %v80, 7
    %v82 = vsub.s32 0, %v81
    %v83 = vrot.slane %v78, %v82
    %v84 = vlaneseq
    %v85 = vshrl.u32 %v84, 7
    %v86 = vsub.s32 1, %v85
    %v87 = vrot.slane %v78, %v86
    %v90 = vmul.f32 %v74, %v83
    %v91 = vmul.f32 %v75, %v87
    %v92 = vmul.f32 %v76, %v83
    %v93 = vmul.f32 %v77, %v87
    %v94 = vadd.f32 %v90, %v91
    %v95 = vadd.f32 %v94, %v92
    %v96 = vadd.f32 %v95, %v93
    %97 = vadd.xlane.f32.xlu0 %v96
    %v98 = vpop.xlane.xlu0 %97
    %v99 = vrot.slane %v98, 4
    %v100 = vadd.f32 %v98, %v99
    %v101 = vrot.slane %v100, 2
    %v102 = vadd.f32 %v100, %v101
    %v103 = vrot.slane %v102, 1
    %v104 = vadd.f32 %v102, %v103
    %s105 = vtos %v104
    %v106 = vlaneseq
    %v107 = vshrl.u32 %v106, 7
    %v108 = vlaneseq
    %v109 = vand.u32 %v108, 127
    %vm110 = vcmp.eq.s32.totalorder %v107, 0
    %vm111 = vcmp.eq.s32.totalorder %v109, 0
    %vm112 = vmand %vm110, %vm111
    %v113 = vstv %s105
    %v114 = vsel %vm112, %v113, 0.0
    %115 = vst [vmem:[#allocation7] sm:$0xff] %v114
    // Predicated region
    $region26: #{tpu_custom_call.1} parent=1 // pred_check
      _
    $region27: #{tpu_custom_call.1} parent=1 // pred_check_branch
      %117 = sbr.rel (0) target = $region29
    $region28: #{tpu_custom_call.1} parent=1 // pred_region
      %s119 = ssub.s32 128, 128
      %120 = vsyncadd [#allocation4], %s119
      %s122 = sshll.u32 [#allocation7], 4
      %s123 = int_to_ptr.vmem [resolvable:$true] %s122
      %125 = dma.vmem_to_hbm [thread:$0]  %s123, 128, %s4, [#allocation4]
    $region29: #{tpu_custom_call.1} parent=1 // pred_fallthru
      _
    // Predicated region
    $region30: #{tpu_custom_call.1} parent=1 // pred_check
      _
    $region31: #{tpu_custom_call.1} parent=1 // pred_check_branch
      %127 = sbr.rel (0) target = $region33
    $region32: #{tpu_custom_call.1} parent=1 // pred_region
      %128 = dma.done [#allocation4], 128
    $region33: #{tpu_custom_call.1} parent=1 // pred_fallthru
      _
    %129 = vsyncpa [#allocation3], 1
    %130 = vsyncpa [#allocation6], 1
    %131 = vsyncpa [#allocation4], 1

</llo_original>
